<compile_context>
chip_gen: v6e
topology: v6e:2x2x1
jax: 0.10.0
libtpu: 0.0.40
codegen_flags: <defaults>
</compile_context>

<pallas_src>
import functools

import jax
import jax.numpy as jnp
from jax.experimental import pallas as pl
from jax.experimental.pallas import tpu as pltpu


LANE = 128      # vreg lane width: pad hidden/output feature dims to this
SUBLANE = 8     # batch tile must be a multiple of this


def _round_up(x, m):
    return ((x + m - 1) // m) * m


# ----------------------------------------------------------------------------
# Fused kernel: the whole MLP for one batch tile.
#   refs = (x_ref, w0_ref, b0_ref, w1_ref, b1_ref, ..., o_ref)
#   x_ref : [TB, din]          (VMEM, f32, real input width)
#   wl    : [Dl, Dl1_pad]      (VMEM, bf16, resident across batch tiles)
#   bl    : [1, Dl1_pad]       (VMEM, f32)
#   o_ref : [TB, output_size]  (VMEM, real output width)
# ----------------------------------------------------------------------------
def _mlp_kernel(*refs, num_layers, activation, out_cols):
    x_ref = refs[0]
    o_ref = refs[-1]
    wb_refs = refs[1:-1]

    h = x_ref[...]  # f32 activations stay in vregs the whole time
    for layer in range(num_layers):
        w = wb_refs[2 * layer][...]        # bf16 [Dl, Dl1_pad]
        b = wb_refs[2 * layer + 1][...]    # f32  [1,  Dl1_pad]
        y = jnp.dot(h.astype(jnp.bfloat16), w,
                    preferred_element_type=jnp.float32)
        y = y + b
        if layer == num_layers - 1:
            # Final layer always uses sigmoid (matches the PyTorch module).
            h = jax.nn.sigmoid(y)
        elif activation == "relu":
            h = jnp.maximum(y, 0.0)
        elif activation == "sigmoid":
            h = jax.nn.sigmoid(y)
        else:  # tanh (validated in the wrapper)
            h = jnp.tanh(y)
    # Store only the real output columns (avoid 128x-inflated HBM writeback).
    o_ref[...] = h[:, :out_cols].astype(o_ref.dtype)


# ----------------------------------------------------------------------------
# Parameter handling.
# ----------------------------------------------------------------------------
def init_network_params(key, input_size, hidden_layers_size, output_size):
    """Deterministic init mirroring the PyTorch module's Linear layer shapes.

    Returns a list of (w_t [din, dout], b [dout]) in float32 (PyTorch weight
    [dout, din] stored transposed)."""
    sizes = [input_size] + list(hidden_layers_size) + [output_size]
    params = []
    for i in range(len(sizes) - 1):
        din, dout = sizes[i], sizes[i + 1]
        key, kw, kb = jax.random.split(key, 3)
        bound = 1.0 / jnp.sqrt(jnp.float32(din))
        w_t = jax.random.uniform(kw, (din, dout), jnp.float32, -bound, bound)
        b = jax.random.uniform(kb, (dout,), jnp.float32, -bound, bound)
        params.append((w_t, b))
    return params


def prepare_params(params):
    """One-time host-side prep.

    * Weights are cast to bf16 (MXU-native, halves DMA/VMEM).
    * Output (lane) dims are zero-padded to multiples of 128.
    * Layer-0 keeps its real input-row count (the input array is NOT padded);
      later layers pad their input rows to match the padded activation width.
      Zero rows guarantee padded lanes (incl. sigmoid(0)=0.5 garbage) never
      contaminate real output columns.
    * Biases stay f32, reshaped to [1, Dout_pad] (bias add done in f32).
    """
    prepared = []
    for idx, (w_t, b) in enumerate(params):
        din, dout = w_t.shape
        din_p = din if idx == 0 else _round_up(din, LANE)
        dout_p = _round_up(dout, LANE)
        w_p = (jnp.zeros((din_p, dout_p), jnp.bfloat16)
               .at[:din, :dout].set(w_t.astype(jnp.bfloat16)))
        b_p = (jnp.zeros((1, dout_p), jnp.float32)
               .at[0, :dout].set(b.astype(jnp.float32)))
        prepared.append((w_p, b_p))
    return prepared


# ----------------------------------------------------------------------------
# Forward pass: one fused pallas_call, batch-tiled. Wrap in jax.jit at the
# call site (all padding/slicing now lives inside the kernel, so the jitted
# program is just the custom call).
# ----------------------------------------------------------------------------
def network_forward(prepared_params, x, *, activation, layer_sizes, tb=512):
    if activation not in ("relu", "sigmoid", "tanh"):
        raise ValueError(f"unknown activation {activation}")

    B, din = x.shape
    num_layers = len(prepared_params)
    output_size = layer_sizes[-1]

    # Batch tile: multiple of 8 sublanes, as large as allowed by `tb`, but
    # keep >= 2 grid tiles when the batch allows so the "parallel" axis can
    # shard across v7x's two TensorCores (costs one ~0.35us step elsewhere).
    TB = min(tb, _round_up(B, SUBLANE))
    if B >= 2 * SUBLANE and pl.cdiv(B, TB) < 2:
        TB = _round_up(pl.cdiv(B, 2), SUBLANE)
    num_tiles = pl.cdiv(B, TB)  # ragged tail handled as a partial tile

    flat_params = []
    in_specs = [pl.BlockSpec((TB, din), lambda i: (i, 0))]
    for w_p, b_p in prepared_params:
        flat_params.append(w_p)
        flat_params.append(b_p)
        # Weights/biases stay resident across batch tiles (constant index map).
        in_specs.append(pl.BlockSpec(w_p.shape, lambda i: (0, 0)))
        in_specs.append(pl.BlockSpec(b_p.shape, lambda i: (0, 0)))
    out_spec = pl.BlockSpec((TB, output_size), lambda i: (i, 0))

    # Advisory cost estimate, using real (unpadded) dims. Transcendentals only
    # for sigmoid/tanh hidden layers plus the final sigmoid.
    flops = 2 * B * sum(layer_sizes[i] * layer_sizes[i + 1]
                        for i in range(len(layer_sizes) - 1))
    trans_per_row = layer_sizes[-1]
    if activation in ("sigmoid", "tanh"):
        trans_per_row += sum(layer_sizes[1:-1])
    bytes_accessed = (
        x.size * x.dtype.itemsize
        + sum(w.size * w.dtype.itemsize + b.size * b.dtype.itemsize
              for w, b in prepared_params)
        + B * output_size * x.dtype.itemsize
    )

    kernel = functools.partial(
        _mlp_kernel,
        num_layers=num_layers,
        activation=activation,
        out_cols=output_size,
    )

    return pl.pallas_call(
        kernel,
        out_shape=jax.ShapeDtypeStruct((B, output_size), x.dtype),
        grid=(num_tiles,),
        in_specs=in_specs,
        out_specs=out_spec,
        compiler_params=pltpu.CompilerParams(
            # Batch tiles are independent -> megacore sharding on v7x.
            dimension_semantics=("parallel",),
            # Explicit headroom (v5e scoped default is only 16 MiB).
            vmem_limit_bytes=32 * 1024 * 1024,
        ),
        cost_estimate=pl.CostEstimate(
            flops=flops,
            transcendentals=B * trans_per_row,
            bytes_accessed=bytes_accessed,
        ),
    )(x, *flat_params)


# ----------------------------------------------------------------------------
# Pure-JAX reference (f32, unpadded) for verification.
# ----------------------------------------------------------------------------
def network_forward_ref(params, x, activation):
    act_fn = {"relu": jax.nn.relu, "sigmoid": jax.nn.sigmoid, "tanh": jnp.tanh}[
        activation
    ]
    for w_t, b in params[:-1]:
        x = act_fn(x @ w_t + b)
    w_t, b = params[-1]
    return jax.nn.sigmoid(x @ w_t + b)


if __name__ == "__main__":
    # Shapes consistent with the module:
    # input_size=32, num_hidden_layers=2, hidden_layers_size=[64, 32],
    # output_size=1, activation='relu', dropout_rate=0.0 (no dropout layers).
    input_size = 32
    hidden_layers_size = [64, 32]
    output_size = 1
    activation = "relu"
    batch = 200  # not a tile multiple: exercises the ragged partial last tile

    key = jax.random.PRNGKey(0)
    kparams, kx = jax.random.split(key)
    params = init_network_params(kparams, input_size, hidden_layers_size, output_size)
    x = jax.random.normal(kx, (batch, input_size), jnp.float32)

    prepared = prepare_params(params)
    layer_sizes = tuple([input_size] + hidden_layers_size + [output_size])

    fwd = jax.jit(
        functools.partial(
            network_forward,
            activation=activation,
            layer_sizes=layer_sizes,
            tb=512,
        )
    )
    out = jax.block_until_ready(fwd(prepared, x))

    ref = network_forward_ref(params, x, activation)
    assert out.shape == (batch, output_size), out.shape
    # bf16 weights -> relaxed tolerance vs the f32 reference.
    assert jnp.allclose(out, ref, atol=2e-2, rtol=2e-2), "mismatch vs reference"

    print("KERNEL_OK")
</pallas_src>

<mosaic_0001>
module attributes {stable_mosaic.version = 11 : i64} {
  func.func @_mlp_kernel(%arg0: i32, %arg1: memref<104x32xf32, #tpu.memory_space<vmem>>, %arg2: memref<32x128xbf16, #tpu.memory_space<vmem>>, %arg3: memref<1x128xf32, #tpu.memory_space<vmem>>, %arg4: memref<128x128xbf16, #tpu.memory_space<vmem>>, %arg5: memref<1x128xf32, #tpu.memory_space<vmem>>, %arg6: memref<128x128xbf16, #tpu.memory_space<vmem>>, %arg7: memref<1x128xf32, #tpu.memory_space<vmem>>, %arg8: memref<104x1xf32, #tpu.memory_space<vmem>>) attributes {dimension_semantics = [#tpu.dimension_semantics<parallel>], iteration_bounds = array<i64: 2>, scalar_prefetch = 0 : i64, scratch_operands = 0 : i64, tpu.core_type = #tpu.core_type<tc>, window_params = [{transform_indices = @transform_0, window_bounds = array<i64: 104, 32>}, {pipeline_mode = #tpu.pipeline_mode<synchronous>, transform_indices = @transform_1, window_bounds = array<i64: 32, 128>}, {pipeline_mode = #tpu.pipeline_mode<synchronous>, transform_indices = @transform_2, window_bounds = array<i64: 1, 128>}, {pipeline_mode = #tpu.pipeline_mode<synchronous>, transform_indices = @transform_3, window_bounds = array<i64: 128, 128>}, {pipeline_mode = #tpu.pipeline_mode<synchronous>, transform_indices = @transform_4, window_bounds = array<i64: 1, 128>}, {pipeline_mode = #tpu.pipeline_mode<synchronous>, transform_indices = @transform_5, window_bounds = array<i64: 128, 128>}, {pipeline_mode = #tpu.pipeline_mode<synchronous>, transform_indices = @transform_6, window_bounds = array<i64: 1, 128>}, {transform_indices = @transform_7, window_bounds = array<i64: 104, 1>}]} {
    %c0 = arith.constant 0 : index
    %c0_0 = arith.constant 0 : index
    %0 = vector.load %arg1[%c0, %c0_0] : memref<104x32xf32, #tpu.memory_space<vmem>>, vector<104x32xf32>
    %c0_1 = arith.constant 0 : index
    %c0_2 = arith.constant 0 : index
    %1 = vector.load %arg2[%c0_1, %c0_2] : memref<32x128xbf16, #tpu.memory_space<vmem>>, vector<32x128xbf16>
    %c0_3 = arith.constant 0 : index
    %c0_4 = arith.constant 0 : index
    %2 = vector.load %arg3[%c0_3, %c0_4] : memref<1x128xf32, #tpu.memory_space<vmem>>, vector<1x128xf32>
    %3 = arith.truncf %0 : vector<104x32xf32> to vector<104x32xbf16>
    %cst = arith.constant dense<0.000000e+00> : vector<104x128xf32>
    %4 = tpu.matmul %3, %1, %cst {dimension_numbers = #tpu.dot_dimension_numbers<[1], [0], [0], [1], [0, 0, 1, 1], [], []>} : vector<104x32xbf16>, vector<32x128xbf16>, vector<104x128xf32> -> vector<104x128xf32>
    %5 = vector.broadcast %2 : vector<1x128xf32> to vector<104x128xf32>
    %6 = arith.addf %4, %5 : vector<104x128xf32>
    %cst_5 = arith.constant 0.000000e+00 : f32
    %7 = vector.broadcast %cst_5 : f32 to vector<104x128xf32>
    %8 = arith.maximumf %6, %7 : vector<104x128xf32>
    %c0_6 = arith.constant 0 : index
    %c0_7 = arith.constant 0 : index
    %9 = vector.load %arg4[%c0_6, %c0_7] : memref<128x128xbf16, #tpu.memory_space<vmem>>, vector<128x128xbf16>
    %c0_8 = arith.constant 0 : index
    %c0_9 = arith.constant 0 : index
    %10 = vector.load %arg5[%c0_8, %c0_9] : memref<1x128xf32, #tpu.memory_space<vmem>>, vector<1x128xf32>
    %11 = arith.truncf %8 : vector<104x128xf32> to vector<104x128xbf16>
    %cst_10 = arith.constant dense<0.000000e+00> : vector<104x128xf32>
    %12 = tpu.matmul %11, %9, %cst_10 {dimension_numbers = #tpu.dot_dimension_numbers<[1], [0], [0], [1], [0, 0, 1, 1], [], []>} : vector<104x128xbf16>, vector<128x128xbf16>, vector<104x128xf32> -> vector<104x128xf32>
    %13 = vector.broadcast %10 : vector<1x128xf32> to vector<104x128xf32>
    %14 = arith.addf %12, %13 : vector<104x128xf32>
    %cst_11 = arith.constant 0.000000e+00 : f32
    %15 = vector.broadcast %cst_11 : f32 to vector<104x128xf32>
    %16 = arith.maximumf %14, %15 : vector<104x128xf32>
    %c0_12 = arith.constant 0 : index
    %c0_13 = arith.constant 0 : index
    %17 = vector.load %arg6[%c0_12, %c0_13] : memref<128x128xbf16, #tpu.memory_space<vmem>>, vector<128x128xbf16>
    %c0_14 = arith.constant 0 : index
    %c0_15 = arith.constant 0 : index
    %18 = vector.load %arg7[%c0_14, %c0_15] : memref<1x128xf32, #tpu.memory_space<vmem>>, vector<1x128xf32>
    %19 = arith.truncf %16 : vector<104x128xf32> to vector<104x128xbf16>
    %cst_16 = arith.constant dense<0.000000e+00> : vector<104x128xf32>
    %20 = tpu.matmul %19, %17, %cst_16 {dimension_numbers = #tpu.dot_dimension_numbers<[1], [0], [0], [1], [0, 0, 1, 1], [], []>} : vector<104x128xbf16>, vector<128x128xbf16>, vector<104x128xf32> -> vector<104x128xf32>
    %21 = vector.broadcast %18 : vector<1x128xf32> to vector<104x128xf32>
    %22 = arith.addf %20, %21 : vector<104x128xf32>
    %23 = arith.negf %22 : vector<104x128xf32>
    %24 = math.exp %23 : vector<104x128xf32>
    %cst_17 = arith.constant 1.000000e+00 : f32
    %25 = vector.broadcast %cst_17 : f32 to vector<104x128xf32>
    %26 = arith.addf %25, %24 : vector<104x128xf32>
    %27 = arith.divf %25, %26 : vector<104x128xf32>
    %28 = vector.extract_strided_slice %27 {offsets = [0, 0], sizes = [104, 1], strides = [1, 1]} : vector<104x128xf32> to vector<104x1xf32>
    %c0_18 = arith.constant 0 : index
    %c0_19 = arith.constant 0 : index
    %29 = vector.load %arg8[%c0_18, %c0_19] : memref<104x1xf32, #tpu.memory_space<vmem>>, vector<104x1xf32>
    tpu.vector_store %arg8[%c0_18, %c0_19], %28 {strides = array<i32>} : memref<104x1xf32, #tpu.memory_space<vmem>>, vector<104x1xf32>,
    return
  }
  func.func @transform_0(%arg0: i32) -> (i32, i32) {
    %c0_i32 = arith.constant 0 : i32
    %c0_i32_0 = arith.constant 0 : i32
    return %arg0, %c0_i32 : i32, i32
  }
  func.func @transform_1(%arg0: i32) -> (i32, i32) {
    %c0_i32 = arith.constant 0 : i32
    %c0_i32_0 = arith.constant 0 : i32
    %c0_i32_1 = arith.constant 0 : i32
    return %c0_i32, %c0_i32_0 : i32, i32
  }
  func.func @transform_2(%arg0: i32) -> (i32, i32) {
    %c0_i32 = arith.constant 0 : i32
    %c0_i32_0 = arith.constant 0 : i32
    %c0_i32_1 = arith.constant 0 : i32
    return %c0_i32, %c0_i32_0 : i32, i32
  }
  func.func @transform_3(%arg0: i32) -> (i32, i32) {
    %c0_i32 = arith.constant 0 : i32
    %c0_i32_0 = arith.constant 0 : i32
    %c0_i32_1 = arith.constant 0 : i32
    return %c0_i32, %c0_i32_0 : i32, i32
  }
  func.func @transform_4(%arg0: i32) -> (i32, i32) {
    %c0_i32 = arith.constant 0 : i32
    %c0_i32_0 = arith.constant 0 : i32
    %c0_i32_1 = arith.constant 0 : i32
    return %c0_i32, %c0_i32_0 : i32, i32
  }
  func.func @transform_5(%arg0: i32) -> (i32, i32) {
    %c0_i32 = arith.constant 0 : i32
    %c0_i32_0 = arith.constant 0 : i32
    %c0_i32_1 = arith.constant 0 : i32
    return %c0_i32, %c0_i32_0 : i32, i32
  }
  func.func @transform_6(%arg0: i32) -> (i32, i32) {
    %c0_i32 = arith.constant 0 : i32
    %c0_i32_0 = arith.constant 0 : i32
    %c0_i32_1 = arith.constant 0 : i32
    return %c0_i32, %c0_i32_0 : i32, i32
  }
  func.func @transform_7(%arg0: i32) -> (i32, i32) {
    %c0_i32 = arith.constant 0 : i32
    %c0_i32_0 = arith.constant 0 : i32
    return %arg0, %c0_i32 : i32, i32
  }
}

</mosaic_0001>

<llo_original>
// kernel: network_forward.1
$region0: #{network_forward.1}
  #allocation0 [shape = 'u32[]', space=smem, size = 0x4, offset = 0x4, fixed_abs, tag = 'smem constant byte address 0x4 - core index']
  #allocation1 [shape = 'u32[144,128]{1,0:T(1,128)}', space=vmem, size = 0x12000, scoped, tag = 'internal scratch']
  %s0 = inlined_call_operand.vmem [shape: f32[200,32], index: 0, kind: input, shape index: {}]
  %s1 = inlined_call_operand.vmem [shape: bf16[32,128], index: 1, kind: input, shape index: {}]
  %s2 = inlined_call_operand.vmem [shape: f32[1,128], index: 2, kind: input, shape index: {}]
  %s3 = inlined_call_operand.vmem [shape: bf16[128,128], index: 3, kind: input, shape index: {}]
  %s4 = inlined_call_operand.vmem [shape: f32[1,128], index: 4, kind: input, shape index: {}]
  %s5 = inlined_call_operand.vmem [shape: bf16[128,128], index: 5, kind: input, shape index: {}]
  %s6 = inlined_call_operand.vmem [shape: f32[1,128], index: 6, kind: input, shape index: {}]
  %s7 = inlined_call_operand.vmem [shape: f32[200,1], index: 7, kind: output, shape index: {}]
  %s8 = sld [smem:[#allocation0]]
  $region109: #{network_forward.1} parent=0
    _
  %s10 = ssub.s32 1, %s8
  %s11 = scalar_select 0, %s10, %s8
  $region1: #{network_forward.1} parent=0
    #allocation2 [shape = 'u8[106496]{0}', space=vmem, size = 0x1a000, scoped, tag = 'output window, operand 0']
    loop: start=0, step=1, limit=4
    $region2: #{network_forward.1} parent=1 // loop_pre_header
      _
    $region3: #{network_forward.1} parent=1 // loop_header
      %s13 = sphi 0, %s17
      %p14 = scmp.ge.s32.totalorder %s13, 4
      %s23 = sphi 0, %s25
      %s26 = sphi 0, %s23
      %s27 = sphi 0, %s26
      %s43 = sphi 0, %s27
      %s47 = sphi 0, %s47
      %s49 = sphi 0, %s47
      %s50 = sphi 0, %s49
      %s64 = sphi 0, %s50
      %s68 = sphi 0, %s68
      %s70 = sphi 0, %s68
      %s71 = sphi 0, %s70
      %s85 = sphi 0, %s71
      %s89 = sphi 0, %s89
      %s91 = sphi 0, %s89
      %s92 = sphi 0, %s91
      %s106 = sphi 0, %s92
      %s110 = sphi 0, %s110
      %s112 = sphi 0, %s110
      %s113 = sphi 0, %s112
      %s127 = sphi 0, %s113
      %s131 = sphi 0, %s131
      %s133 = sphi 0, %s131
      %s134 = sphi 0, %s133
      %s148 = sphi 0, %s134
      %s152 = sphi 0, %s152
      %s154 = sphi 0, %s152
      %s155 = sphi 0, %s154
      %s169 = sphi 0, %s155
      %s175 = sphi 0, %s177
      %s178 = sphi 0, %s175
      %s179 = sphi 0, %s178
      %s195 = sphi 0, %s179
    $region4: #{network_forward.1} parent=1 // loop_header_branch
      %16 = sbr.rel (%p14) target = $region8
    $region5: #{network_forward.1} parent=1 // loop_body
      %s18 = ssub.s32 %s13, 1
      %s19 = ssub.s32 %s13, 2
      %s20 = sadd.s32 %s13, 1
      %s21 = ssub.s32 %s13, %s20
      %p22 = scmp.eq.s32.totalorder %s21, 0
      %s24 = sadd.s32 %s23, 1
      %s25 = scalar_select %p22, %s23, %s24
      %p28 = pneg %p22
      %p29 = scmp.eq.s32.totalorder %s13, 1
      %p30 = por %p28, %p29
      %p31 = scmp.ne.s32.totalorder %s23, %s26
      %p32 = scmp.eq.s32.totalorder %s13, 0
      %p33 = por %p31, %p32
      %p34 = scmp.ne.s32.totalorder %s23, %s26
      %p35 = scmp.eq.s32.totalorder %s18, 1
      %p36 = por %p34, %p35
      %p37 = scmp.ne.s32.totalorder %s26, %s27
      %p38 = scmp.eq.s32.totalorder %s18, 0
      %p39 = por %p37, %p38
      %p40 = scmp.ne.s32.totalorder %s26, %s27
      %p41 = scmp.eq.s32.totalorder %s19, 1
      %p42 = por %p40, %p41
      %p44 = scmp.ne.s32.totalorder %s27, %s43
      %p45 = scmp.eq.s32.totalorder %s19, 0
      %p46 = por %p44, %p45
      %s48 = sadd.s32 %s47, 1
      %p51 = scmp.eq.s32.totalorder %s13, 1
      %p52 = scmp.ne.s32.totalorder %s47, %s49
      %p53 = scmp.eq.s32.totalorder %s13, 0
      %p54 = por %p52, %p53
      %p55 = scmp.ne.s32.totalorder %s47, %s49
      %p56 = scmp.eq.s32.totalorder %s18, 1
      %p57 = por %p55, %p56
      %p58 = scmp.ne.s32.totalorder %s49, %s50
      %p59 = scmp.eq.s32.totalorder %s18, 0
      %p60 = por %p58, %p59
      %p61 = scmp.ne.s32.totalorder %s49, %s50
      %p62 = scmp.eq.s32.totalorder %s19, 1
      %p63 = por %p61, %p62
      %p65 = scmp.ne.s32.totalorder %s50, %s64
      %p66 = scmp.eq.s32.totalorder %s19, 0
      %p67 = por %p65, %p66
      %s69 = sadd.s32 %s68, 1
      %p72 = scmp.eq.s32.totalorder %s13, 1
      %p73 = scmp.ne.s32.totalorder %s68, %s70
      %p74 = scmp.eq.s32.totalorder %s13, 0
      %p75 = por %p73, %p74
      %p76 = scmp.ne.s32.totalorder %s68, %s70
      %p77 = scmp.eq.s32.totalorder %s18, 1
      %p78 = por %p76, %p77
      %p79 = scmp.ne.s32.totalorder %s70, %s71
      %p80 = scmp.eq.s32.totalorder %s18, 0
      %p81 = por %p79, %p80
      %p82 = scmp.ne.s32.totalorder %s70, %s71
      %p83 = scmp.eq.s32.totalorder %s19, 1
      %p84 = por %p82, %p83
      %p86 = scmp.ne.s32.totalorder %s71, %s85
      %p87 = scmp.eq.s32.totalorder %s19, 0
      %p88 = por %p86, %p87
      %s90 = sadd.s32 %s89, 1
      %p93 = scmp.eq.s32.totalorder %s13, 1
      %p94 = scmp.ne.s32.totalorder %s89, %s91
      %p95 = scmp.eq.s32.totalorder %s13, 0
      %p96 = por %p94, %p95
      %p97 = scmp.ne.s32.totalorder %s89, %s91
      %p98 = scmp.eq.s32.totalorder %s18, 1
      %p99 = por %p97, %p98
      %p100 = scmp.ne.s32.totalorder %s91, %s92
      %p101 = scmp.eq.s32.totalorder %s18, 0
      %p102 = por %p100, %p101
      %p103 = scmp.ne.s32.totalorder %s91, %s92
      %p104 = scmp.eq.s32.totalorder %s19, 1
      %p105 = por %p103, %p104
      %p107 = scmp.ne.s32.totalorder %s92, %s106
      %p108 = scmp.eq.s32.totalorder %s19, 0
      %p109 = por %p107, %p108
      %s111 = sadd.s32 %s110, 1
      %p114 = scmp.eq.s32.totalorder %s13, 1
      %p115 = scmp.ne.s32.totalorder %s110, %s112
      %p116 = scmp.eq.s32.totalorder %s13, 0
      %p117 = por %p115, %p116
      %p118 = scmp.ne.s32.totalorder %s110, %s112
      %p119 = scmp.eq.s32.totalorder %s18, 1
      %p120 = por %p118, %p119
      %p121 = scmp.ne.s32.totalorder %s112, %s113
      %p122 = scmp.eq.s32.totalorder %s18, 0
      %p123 = por %p121, %p122
      %p124 = scmp.ne.s32.totalorder %s112, %s113
      %p125 = scmp.eq.s32.totalorder %s19, 1
      %p126 = por %p124, %p125
      %p128 = scmp.ne.s32.totalorder %s113, %s127
      %p129 = scmp.eq.s32.totalorder %s19, 0
      %p130 = por %p128, %p129
      %s132 = sadd.s32 %s131, 1
      %p135 = scmp.eq.s32.totalorder %s13, 1
      %p136 = scmp.ne.s32.totalorder %s131, %s133
      %p137 = scmp.eq.s32.totalorder %s13, 0
      %p138 = por %p136, %p137
      %p139 = scmp.ne.s32.totalorder %s131, %s133
      %p140 = scmp.eq.s32.totalorder %s18, 1
      %p141 = por %p139, %p140
      %p142 = scmp.ne.s32.totalorder %s133, %s134
      %p143 = scmp.eq.s32.totalorder %s18, 0
      %p144 = por %p142, %p143
      %p145 = scmp.ne.s32.totalorder %s133, %s134
      %p146 = scmp.eq.s32.totalorder %s19, 1
      %p147 = por %p145, %p146
      %p149 = scmp.ne.s32.totalorder %s134, %s148
      %p150 = scmp.eq.s32.totalorder %s19, 0
      %p151 = por %p149, %p150
      %s153 = sadd.s32 %s152, 1
      %p156 = scmp.eq.s32.totalorder %s13, 1
      %p157 = scmp.ne.s32.totalorder %s152, %s154
      %p158 = scmp.eq.s32.totalorder %s13, 0
      %p159 = por %p157, %p158
      %p160 = scmp.ne.s32.totalorder %s152, %s154
      %p161 = scmp.eq.s32.totalorder %s18, 1
      %p162 = por %p160, %p161
      %p163 = scmp.ne.s32.totalorder %s154, %s155
      %p164 = scmp.eq.s32.totalorder %s18, 0
      %p165 = por %p163, %p164
      %p166 = scmp.ne.s32.totalorder %s154, %s155
      %p167 = scmp.eq.s32.totalorder %s19, 1
      %p168 = por %p166, %p167
      %p170 = scmp.ne.s32.totalorder %s155, %s169
      %p171 = scmp.eq.s32.totalorder %s19, 0
      %p172 = por %p170, %p171
      %s173 = ssub.s32 %s13, %s20
      %p174 = scmp.eq.s32.totalorder %s173, 0
      %s176 = sadd.s32 %s175, 1
      %s177 = scalar_select %p174, %s175, %s176
      %p180 = pneg %p174
      %p181 = scmp.eq.s32.totalorder %s13, 1
      %p182 = por %p180, %p181
      %p183 = scmp.ne.s32.totalorder %s175, %s178
      %p184 = scmp.eq.s32.totalorder %s13, 0
      %p185 = por %p183, %p184
      %p186 = scmp.ne.s32.totalorder %s175, %s178
      %p187 = scmp.eq.s32.totalorder %s18, 1
      %p188 = por %p186, %p187
      %p189 = scmp.ne.s32.totalorder %s178, %s179
      %p190 = scmp.eq.s32.totalorder %s18, 0
      %p191 = por %p189, %p190
      %p192 = scmp.ne.s32.totalorder %s178, %s179
      %p193 = scmp.eq.s32.totalorder %s19, 1
      %p194 = por %p192, %p193
      %p196 = scmp.ne.s32.totalorder %s179, %s195
      %p197 = scmp.eq.s32.totalorder %s19, 0
      %p198 = por %p196, %p197
      %p199 = scmp.le.s32.totalorder 1, %s13
      %p200 = scmp.lt.s32.totalorder %s13, 3
      %p201 = pnand %p199, %p200
      %p202 = pneg %p201
      // Predicated region
      $region9: #{network_forward.1} parent=5 // pred_check
        _
      $region10: #{network_forward.1} parent=5 // pred_check_branch
        %204 = sbr.rel (%p201) target = $region12
      $region11: #{network_forward.1} parent=5 // pred_region
        %s205 = ssub.s32 %s13, 1
        // Predicated region
        $region13: #{network_forward.1} parent=11 // pred_check
          %p206 = pneg %p60
        $region14: #{network_forward.1} parent=11 // pred_check_branch
          %208 = sbr.rel (%p206) target = $region16
        $region15: #{network_forward.1} parent=11 // pred_region
          _
        $region16: #{network_forward.1} parent=11 // pred_fallthru
          _
        // Predicated region
        $region17: #{network_forward.1} parent=11 // pred_check
          %p209 = pneg %p81
        $region18: #{network_forward.1} parent=11 // pred_check_branch
          %211 = sbr.rel (%p209) target = $region20
        $region19: #{network_forward.1} parent=11 // pred_region
          _
        $region20: #{network_forward.1} parent=11 // pred_fallthru
          _
        // Predicated region
        $region21: #{network_forward.1} parent=11 // pred_check
          %p212 = pneg %p102
        $region22: #{network_forward.1} parent=11 // pred_check_branch
          %214 = sbr.rel (%p212) target = $region24
        $region23: #{network_forward.1} parent=11 // pred_region
          _
        $region24: #{network_forward.1} parent=11 // pred_fallthru
          _
        // Predicated region
        $region25: #{network_forward.1} parent=11 // pred_check
          %p215 = pneg %p123
        $region26: #{network_forward.1} parent=11 // pred_check_branch
          %217 = sbr.rel (%p215) target = $region28
        $region27: #{network_forward.1} parent=11 // pred_region
          _
        $region28: #{network_forward.1} parent=11 // pred_fallthru
          _
        // Predicated region
        $region29: #{network_forward.1} parent=11 // pred_check
          %p218 = pneg %p144
        $region30: #{network_forward.1} parent=11 // pred_check_branch
          %220 = sbr.rel (%p218) target = $region32
        $region31: #{network_forward.1} parent=11 // pred_region
          _
        $region32: #{network_forward.1} parent=11 // pred_fallthru
          _
        // Predicated region
        $region33: #{network_forward.1} parent=11 // pred_check
          %p221 = pneg %p165
        $region34: #{network_forward.1} parent=11 // pred_check_branch
          %223 = sbr.rel (%p221) target = $region36
        $region35: #{network_forward.1} parent=11 // pred_region
          _
        $region36: #{network_forward.1} parent=11 // pred_fallthru
          _
      $region12: #{network_forward.1} parent=5 // pred_fallthru
        _
      %p224 = scmp.lt.s32.totalorder %s13, 2
      // Predicated region
      $region37: #{network_forward.1} parent=5 // pred_check
        %p225 = pneg %p224
      $region38: #{network_forward.1} parent=5 // pred_check_branch
        %227 = sbr.rel (%p225) target = $region40
      $region39: #{network_forward.1} parent=5 // pred_region
        // Predicated region
        $region41: #{network_forward.1} parent=39 // pred_check
          %p228 = pneg %p33
        $region42: #{network_forward.1} parent=39 // pred_check_branch
          %230 = sbr.rel (%p228) target = $region44
        $region43: #{network_forward.1} parent=39 // pred_region
          %s231 = smul.u32 13, %s13
          %s232 = ssub.s32 25, %s231
          %p233 = scmp.lt.s32.totalorder %s232, 13
          %s234 = scalar_select %p233, %s232, 13
          %s235 = smul.u32 128, %s234
          %p236 = scmp.lt.s32.totalorder %s231, 24
          %s237 = scalar_select %p236, %s231, 24
          %s238 = smul.addr %s237, 8
          %s239 = scalar_lea.vmem %s0, %s238
          %s240 = smul.u32 13, %s13
          %s241 = ssub.s32 25, %s240
          %p242 = scmp.lt.s32.totalorder %s241, 13
          %s243 = scalar_select %p242, %s241, 13
          %s244 = smul.u32 128, %s243
        $region44: #{network_forward.1} parent=39 // pred_fallthru
          _
      $region40: #{network_forward.1} parent=5 // pred_fallthru
        _
      %p245 = scmp.le.s32.totalorder 1, %s13
      %p246 = scmp.lt.s32.totalorder %s13, 3
      %p247 = pnand %p245, %p246
      %p248 = pneg %p247
      // Predicated region
      $region45: #{network_forward.1} parent=5 // pred_check
        _
      $region46: #{network_forward.1} parent=5 // pred_check_branch
        %250 = sbr.rel (%p247) target = $region48
      $region47: #{network_forward.1} parent=5 // pred_region
        %s251 = ssub.s32 %s13, 1
        %s252 = smul.u32 13, %s18
        %s253 = ssub.s32 25, %s252
        %p254 = scmp.lt.s32.totalorder %s253, 13
        %s255 = scalar_select %p254, %s253, 13
        %s256 = smul.u32 128, %s255
        %p257 = scmp.lt.s32.totalorder %s252, 24
        %s258 = scalar_select %p257, %s252, 24
        %s259 = smul.addr %s258, 8
        %s260 = scalar_lea.vmem %s0, %s259
        %p261 = pneg %p39
        %p262 = pneg %p36
        %p263 = pneg %p60
        %p264 = pneg %p57
        %p265 = pneg %p81
        %p266 = pneg %p78
        %p267 = pneg %p102
        %p268 = pneg %p99
        %p269 = pneg %p123
        %p270 = pneg %p120
        %p271 = pneg %p144
        %p272 = pneg %p141
        %p273 = pneg %p165
        %p274 = pneg %p162
        %p275 = pneg %p191
        %p276 = pneg %p188
        %s277 = sand.u32 %s178, 1
        %s278 = sand.u32 %s178, 1
        %s279 = smul.addr %s278, 104
        %s280 = scalar_lea.vmem [#allocation2], %s279
        %s281 = smul.u32 13, %s18
        %s282 = ssub.s32 25, %s281
        %p283 = scmp.lt.s32.totalorder %s282, 13
        %s284 = scalar_select %p283, %s282, 13
        %s285 = smul.u32 128, %s284
        %p286 = scmp.lt.s32.totalorder %s281, 24
        %s287 = scalar_select %p286, %s281, 24
        %s288 = smul.addr %s287, 8
        %s289 = scalar_lea.vmem %s0, %s288
        %s290 = smul.u32 13, %s18
        %s291 = ssub.s32 25, %s290
        %p292 = scmp.lt.s32.totalorder %s291, 13
        %s293 = scalar_select %p292, %s291, 13
        %s294 = smul.u32 128, %s293
        %s295 = smul.u32 13, %s18
        %s296 = ssub.s32 25, %s295
        %p297 = scmp.lt.s32.totalorder %s296, 13
        %s298 = scalar_select %p297, %s296, 13
        %s299 = smul.u32 128, %s298
        %v301 = vld [vmem:[%s289] sm:$0xff]
        %v302 = vld [vmem:[%s289 + $0x8] sm:$0xff]
        %v303 = vld [vmem:[%s289 + $0x10] sm:$0xff]
        %v304 = vld [vmem:[%s289 + $0x18] sm:$0xff]
        %v305 = vld [vmem:[%s289 + $0x20] sm:$0xff]
        %v306 = vld [vmem:[%s289 + $0x28] sm:$0xff]
        %v307 = vld [vmem:[%s289 + $0x30] sm:$0xff]
        %v308 = vld [vmem:[%s289 + $0x38] sm:$0xff]
        %v309 = vld [vmem:[%s289 + $0x40] sm:$0xff]
        %v310 = vld [vmem:[%s289 + $0x48] sm:$0xff]
        %v311 = vld [vmem:[%s289 + $0x50] sm:$0xff]
        %v312 = vld [vmem:[%s289 + $0x58] sm:$0xff]
        %v313 = vld [vmem:[%s289 + $0x60] sm:$0xff]
        %v314 = vld [vmem:[%s1] sm:$0xf]
        %v315 = vld [vmem:[%s1 + $0x4] sm:$0xf]
        %v316 = vld [vmem:[%s1 + $0x8] sm:$0xf]
        %v317 = vld [vmem:[%s1 + $0xc] sm:$0xf]
        %v318 = vld [vmem:[%s2] sm:$0x1]
        %v319 = vpack.c.bf16 %v302, %v301
        %v320 = vpack.c.bf16 %v304, %v303
        %v321 = vpack.c.bf16 %v306, %v305
        %v322 = vpack.c.bf16 %v308, %v307
        %v323 = vpack.c.bf16 %v310, %v309
        %v324 = vpack.c.bf16 %v312, %v311
        %v325 = vpack.c.bf16 %v313, %v313
        %v327 = vlaneseq
        %v328 = vshrl.u32 %v327, 7
        %v329 = vsub.s32 0, %v328
        %v330 = vrot.slane %v318, %v329
        %v336 = vunpack.c.l.b16 %v314
        %v337 = vunpack.c.l.b16 %v315
        %v338 = vunpack.c.l.b16 %v316
        %v339 = vunpack.c.l.b16 %v317
        %v340 = vpack.c.b16 %v337, %v336
        %v341 = vpack.c.b16 %v339, %v338
        %vm344 = vcmask 261120
        %v346 = vsel %vm344, %v319, 0
        %v349 = vsel %vm344, %v320, 0
        %v352 = vsel %vm344, %v321, 0
        %v355 = vsel %vm344, %v322, 0
        %v358 = vsel %vm344, %v323, 0
        %v361 = vsel %vm344, %v324, 0
        %v364 = vsel %vm344, %v325, 0
        %366 = vmatprep.subr.bf16.mxu0 0
        %367 = vmatpush1.bf16.msra.mxu0 0
        %368 = vmatprep.subr.bf16.mxu0 0
        %369 = vmatpush1.bf16.msra.mxu0 0
        %370 = vmatprep.subr.bf16.mxu0 0
        %371 = vmatpush1.bf16.msra.mxu0 0
        %372 = vmatprep.subr.bf16.mxu0 0
        %373 = vmatpush1.bf16.msra.mxu0 0
        %374 = vmatprep.subr.bf16.mxu0 0
        %375 = vmatpush1.bf16.msra.mxu0 0
        %376 = vmatprep.subr.bf16.mxu0 0
        %377 = vmatpush1.bf16.msra.mxu0 0
        %378 = vmatprep.subr.bf16.mxu0 0
        %379 = vmatpush1.bf16.msra.mxu0 %v341
        %380 = vmatprep.subr.bf16.mxu0 0
        %381 = vmatpush1.bf16.msra.mxu0 %v340
        %382 = vmatprep.subr.bf16.mxu0 0
        %383 = vmatpush2.bf16.msra.mxu0 0
        %384 = vmatprep.subr.bf16.mxu0 0
        %385 = vmatpush2.bf16.msra.mxu0 0
        %386 = vmatprep.subr.bf16.mxu0 0
        %387 = vmatpush2.bf16.msra.mxu0 0
        %388 = vmatprep.subr.bf16.mxu0 0
        %389 = vmatpush2.bf16.msra.mxu0 0
        %390 = vmatprep.subr.bf16.mxu0 0
        %391 = vmatpush2.bf16.msra.mxu0 0
        %392 = vmatprep.subr.bf16.mxu0 0
        %393 = vmatpush2.bf16.msra.mxu0 0
        %394 = vmatprep.subr.bf16.mxu0 0
        %395 = vmatpush2.bf16.msra.mxu0 0
        %396 = vmatprep.subr.bf16.mxu0 0
        %397 = vmatpush2.bf16.msra.mxu0 0
        %398 = vmatprep.mubr.bf16.mxu0 0
        %399 = vmatmul.mubr.bf16.gmra.mxu0 %v346
        %v400 = vpop.f32.mrf.mxu0
        %v401 = vadd.f32 %v330, %v400
        %v402 = vpop.f32.mrf.mxu0
        %v403 = vpop.f32.mrf.mxu0
        %v404 = vadd.f32 %v330, %v403
        %v405 = vpop.f32.mrf.mxu0
        %406 = vmatprep.mubr.bf16.mxu0 0
        %407 = vmatmul.mubr.bf16.gmra.mxu0 %v349
        %v408 = vpop.f32.mrf.mxu0
        %v409 = vadd.f32 %v330, %v408
        %v410 = vpop.f32.mrf.mxu0
        %v411 = vpop.f32.mrf.mxu0
        %v412 = vadd.f32 %v330, %v411
        %v413 = vpop.f32.mrf.mxu0
        %414 = vmatprep.mubr.bf16.mxu0 0
        %415 = vmatmul.mubr.bf16.gmra.mxu0 %v352
        %v416 = vpop.f32.mrf.mxu0
        %v417 = vadd.f32 %v330, %v416
        %v418 = vpop.f32.mrf.mxu0
        %v419 = vpop.f32.mrf.mxu0
        %v420 = vadd.f32 %v330, %v419
        %v421 = vpop.f32.mrf.mxu0
        %422 = vmatprep.mubr.bf16.mxu0 0
        %423 = vmatmul.mubr.bf16.gmra.mxu0 %v355
        %v424 = vpop.f32.mrf.mxu0
        %v425 = vadd.f32 %v330, %v424
        %v426 = vpop.f32.mrf.mxu0
        %v427 = vpop.f32.mrf.mxu0
        %v428 = vadd.f32 %v330, %v427
        %v429 = vpop.f32.mrf.mxu0
        %430 = vmatprep.mubr.bf16.mxu0 0
        %431 = vmatmul.mubr.bf16.gmra.mxu0 %v358
        %v432 = vpop.f32.mrf.mxu0
        %v433 = vadd.f32 %v330, %v432
        %v434 = vpop.f32.mrf.mxu0
        %v435 = vpop.f32.mrf.mxu0
        %v436 = vadd.f32 %v330, %v435
        %v437 = vpop.f32.mrf.mxu0
        %438 = vmatprep.mubr.bf16.mxu0 0
        %439 = vmatmul.mubr.bf16.gmra.mxu0 %v361
        %v440 = vpop.f32.mrf.mxu0
        %v441 = vadd.f32 %v330, %v440
        %v442 = vpop.f32.mrf.mxu0
        %v443 = vpop.f32.mrf.mxu0
        %v444 = vadd.f32 %v330, %v443
        %v445 = vpop.f32.mrf.mxu0
        %446 = vmatprep.mubr.bf16.mxu0 0
        %447 = vmatmul.mubr.bf16.gmra.mxu0 %v364
        %v448 = vpop.f32.mrf.mxu0
        %v449 = vadd.f32 %v330, %v448
        %v450 = vpop.f32.mrf.mxu0
        %v451 = vpop.f32.mrf.mxu0
        %v452 = vpop.f32.mrf.mxu0
        %453 = vdwg.mxu0
        %v454 = vmax.f32 %v401, 0.0
        %v455 = vmax.f32 %v404, 0.0
        %v456 = vmax.f32 %v409, 0.0
        %v457 = vmax.f32 %v412, 0.0
        %v458 = vmax.f32 %v417, 0.0
        %v459 = vmax.f32 %v420, 0.0
        %v460 = vmax.f32 %v425, 0.0
        %v461 = vmax.f32 %v428, 0.0
        %v462 = vmax.f32 %v433, 0.0
        %v463 = vmax.f32 %v436, 0.0
        %v464 = vmax.f32 %v441, 0.0
        %v465 = vmax.f32 %v444, 0.0
        %v466 = vmax.f32 %v449, 0.0
        %v467 = vld [vmem:[%s3] sm:$0xf]
        %v468 = vld [vmem:[%s3 + $0x4] sm:$0xf]
        %v469 = vld [vmem:[%s3 + $0x8] sm:$0xf]
        %v470 = vld [vmem:[%s3 + $0xc] sm:$0xf]
        %v471 = vld [vmem:[%s3 + $0x10] sm:$0xf]
        %v472 = vld [vmem:[%s3 + $0x14] sm:$0xf]
        %v473 = vld [vmem:[%s3 + $0x18] sm:$0xf]
        %v474 = vld [vmem:[%s3 + $0x1c] sm:$0xf]
        %v475 = vld [vmem:[%s3 + $0x20] sm:$0xf]
        %v476 = vld [vmem:[%s3 + $0x24] sm:$0xf]
        %v477 = vld [vmem:[%s3 + $0x28] sm:$0xf]
        %v478 = vld [vmem:[%s3 + $0x2c] sm:$0xf]
        %v479 = vld [vmem:[%s3 + $0x30] sm:$0xf]
        %v480 = vld [vmem:[%s3 + $0x34] sm:$0xf]
        %v481 = vld [vmem:[%s3 + $0x38] sm:$0xf]
        %v482 = vld [vmem:[%s3 + $0x3c] sm:$0xf]
        %v483 = vld [vmem:[%s4] sm:$0x1]
        %v484 = vpack.c.bf16 %v455, %v454
        %v485 = vpack.c.bf16 %v457, %v456
        %v486 = vpack.c.bf16 %v459, %v458
        %v487 = vpack.c.bf16 %v461, %v460
        %v488 = vpack.c.bf16 %v463, %v462
        %v489 = vpack.c.bf16 %v465, %v464
        %v490 = vpack.c.bf16 %v466, %v466
        %v492 = vlaneseq
        %v493 = vshrl.u32 %v492, 7
        %v494 = vsub.s32 0, %v493
        %v495 = vrot.slane %v483, %v494
        %v513 = vunpack.c.l.b16 %v467
        %v514 = vunpack.c.l.b16 %v468
        %v515 = vunpack.c.l.b16 %v469
        %v516 = vunpack.c.l.b16 %v470
        %v517 = vunpack.c.l.b16 %v471
        %v518 = vunpack.c.l.b16 %v472
        %v519 = vunpack.c.l.b16 %v473
        %v520 = vunpack.c.l.b16 %v474
        %v521 = vunpack.c.l.b16 %v475
        %v522 = vunpack.c.l.b16 %v476
        %v523 = vunpack.c.l.b16 %v477
        %v524 = vunpack.c.l.b16 %v478
        %v525 = vunpack.c.l.b16 %v479
        %v526 = vunpack.c.l.b16 %v480
        %v527 = vunpack.c.l.b16 %v481
        %v528 = vunpack.c.l.b16 %v482
        %v529 = vpack.c.b16 %v514, %v513
        %v530 = vpack.c.b16 %v516, %v515
        %v531 = vpack.c.b16 %v518, %v517
        %v532 = vpack.c.b16 %v520, %v519
        %v533 = vpack.c.b16 %v522, %v521
        %v534 = vpack.c.b16 %v524, %v523
        %v535 = vpack.c.b16 %v526, %v525
        %v536 = vpack.c.b16 %v528, %v527
        %545 = vmatprep.subr.bf16.mxu0 0
        %546 = vmatpush1.bf16.msra.mxu0 %v536
        %547 = vmatprep.subr.bf16.mxu0 0
        %548 = vmatpush1.bf16.msra.mxu0 %v535
        %549 = vmatprep.subr.bf16.mxu0 0
        %550 = vmatpush1.bf16.msra.mxu0 %v534
        %551 = vmatprep.subr.bf16.mxu0 0
        %552 = vmatpush1.bf16.msra.mxu0 %v533
        %553 = vmatprep.subr.bf16.mxu0 0
        %554 = vmatpush1.bf16.msra.mxu0 %v532
        %555 = vmatprep.subr.bf16.mxu0 0
        %556 = vmatpush1.bf16.msra.mxu0 %v531
        %557 = vmatprep.subr.bf16.mxu0 0
        %558 = vmatpush1.bf16.msra.mxu0 %v530
        %559 = vmatprep.subr.bf16.mxu0 0
        %560 = vmatpush1.bf16.msra.mxu0 %v529
        %561 = vmatprep.subr.bf16.mxu0 0
        %562 = vmatpush2.bf16.msra.mxu0 0
        %563 = vmatprep.subr.bf16.mxu0 0
        %564 = vmatpush2.bf16.msra.mxu0 0
        %565 = vmatprep.subr.bf16.mxu0 0
        %566 = vmatpush2.bf16.msra.mxu0 0
        %567 = vmatprep.subr.bf16.mxu0 0
        %568 = vmatpush2.bf16.msra.mxu0 0
        %569 = vmatprep.subr.bf16.mxu0 0
        %570 = vmatpush2.bf16.msra.mxu0 0
        %571 = vmatprep.subr.bf16.mxu0 0
        %572 = vmatpush2.bf16.msra.mxu0 0
        %573 = vmatprep.subr.bf16.mxu0 0
        %574 = vmatpush2.bf16.msra.mxu0 0
        %575 = vmatprep.subr.bf16.mxu0 0
        %576 = vmatpush2.bf16.msra.mxu0 0
        %577 = vmatprep.mubr.bf16.mxu0 0
        %578 = vmatmul.mubr.bf16.gmra.mxu0 %v484
        %v579 = vpop.f32.mrf.mxu0
        %v580 = vadd.f32 %v495, %v579
        %v581 = vpop.f32.mrf.mxu0
        %v582 = vpop.f32.mrf.mxu0
        %v583 = vadd.f32 %v495, %v582
        %v584 = vpop.f32.mrf.mxu0
        %585 = vmatprep.mubr.bf16.mxu0 0
        %586 = vmatmul.mubr.bf16.gmra.mxu0 %v485
        %v587 = vpop.f32.mrf.mxu0
        %v588 = vadd.f32 %v495, %v587
        %v589 = vpop.f32.mrf.mxu0
        %v590 = vpop.f32.mrf.mxu0
        %v591 = vadd.f32 %v495, %v590
        %v592 = vpop.f32.mrf.mxu0
        %593 = vmatprep.mubr.bf16.mxu0 0
        %594 = vmatmul.mubr.bf16.gmra.mxu0 %v486
        %v595 = vpop.f32.mrf.mxu0
        %v596 = vadd.f32 %v495, %v595
        %v597 = vpop.f32.mrf.mxu0
        %v598 = vpop.f32.mrf.mxu0
        %v599 = vadd.f32 %v495, %v598
        %v600 = vpop.f32.mrf.mxu0
        %601 = vmatprep.mubr.bf16.mxu0 0
        %602 = vmatmul.mubr.bf16.gmra.mxu0 %v487
        %v603 = vpop.f32.mrf.mxu0
        %v604 = vadd.f32 %v495, %v603
        %v605 = vpop.f32.mrf.mxu0
        %v606 = vpop.f32.mrf.mxu0
        %v607 = vadd.f32 %v495, %v606
        %v608 = vpop.f32.mrf.mxu0
        %609 = vmatprep.mubr.bf16.mxu0 0
        %610 = vmatmul.mubr.bf16.gmra.mxu0 %v488
        %v611 = vpop.f32.mrf.mxu0
        %v612 = vadd.f32 %v495, %v611
        %v613 = vpop.f32.mrf.mxu0
        %v614 = vpop.f32.mrf.mxu0
        %v615 = vadd.f32 %v495, %v614
        %v616 = vpop.f32.mrf.mxu0
        %617 = vmatprep.mubr.bf16.mxu0 0
        %618 = vmatmul.mubr.bf16.gmra.mxu0 %v489
        %v619 = vpop.f32.mrf.mxu0
        %v620 = vadd.f32 %v495, %v619
        %v621 = vpop.f32.mrf.mxu0
        %v622 = vpop.f32.mrf.mxu0
        %v623 = vadd.f32 %v495, %v622
        %v624 = vpop.f32.mrf.mxu0
        %625 = vmatprep.mubr.bf16.mxu0 0
        %626 = vmatmul.mubr.bf16.gmra.mxu0 %v490
        %v627 = vpop.f32.mrf.mxu0
        %v628 = vadd.f32 %v495, %v627
        %v629 = vpop.f32.mrf.mxu0
        %v630 = vpop.f32.mrf.mxu0
        %v631 = vpop.f32.mrf.mxu0
        %632 = vdwg.mxu0
        %v633 = vmax.f32 %v580, 0.0
        %v634 = vmax.f32 %v583, 0.0
        %v635 = vmax.f32 %v588, 0.0
        %v636 = vmax.f32 %v591, 0.0
        %v637 = vmax.f32 %v596, 0.0
        %v638 = vmax.f32 %v599, 0.0
        %v639 = vmax.f32 %v604, 0.0
        %v640 = vmax.f32 %v607, 0.0
        %v641 = vmax.f32 %v612, 0.0
        %v642 = vmax.f32 %v615, 0.0
        %v643 = vmax.f32 %v620, 0.0
        %v644 = vmax.f32 %v623, 0.0
        %v645 = vmax.f32 %v628, 0.0
        %v646 = vld [vmem:[%s5] sm:$0xf]
        %v647 = vld [vmem:[%s5 + $0x4] sm:$0xf]
        %v648 = vld [vmem:[%s5 + $0x8] sm:$0xf]
        %v649 = vld [vmem:[%s5 + $0xc] sm:$0xf]
        %v650 = vld [vmem:[%s5 + $0x10] sm:$0xf]
        %v651 = vld [vmem:[%s5 + $0x14] sm:$0xf]
        %v652 = vld [vmem:[%s5 + $0x18] sm:$0xf]
        %v653 = vld [vmem:[%s5 + $0x1c] sm:$0xf]
        %v654 = vld [vmem:[%s5 + $0x20] sm:$0xf]
        %v655 = vld [vmem:[%s5 + $0x24] sm:$0xf]
        %v656 = vld [vmem:[%s5 + $0x28] sm:$0xf]
        %v657 = vld [vmem:[%s5 + $0x2c] sm:$0xf]
        %v658 = vld [vmem:[%s5 + $0x30] sm:$0xf]
        %v659 = vld [vmem:[%s5 + $0x34] sm:$0xf]
        %v660 = vld [vmem:[%s5 + $0x38] sm:$0xf]
        %v661 = vld [vmem:[%s5 + $0x3c] sm:$0xf]
        %v662 = vld [vmem:[%s6] sm:$0x1]
        %v663 = vpack.c.bf16 %v634, %v633
        %v664 = vpack.c.bf16 %v636, %v635
        %v665 = vpack.c.bf16 %v638, %v637
        %v666 = vpack.c.bf16 %v640, %v639
        %v667 = vpack.c.bf16 %v642, %v641
        %v668 = vpack.c.bf16 %v644, %v643
        %v669 = vpack.c.bf16 %v645, %v645
        %v671 = vlaneseq
        %v672 = vshrl.u32 %v671, 7
        %v673 = vsub.s32 0, %v672
        %v674 = vrot.slane %v662, %v673
        %v692 = vunpack.c.l.b16 %v646
        %v693 = vunpack.c.l.b16 %v647
        %v694 = vunpack.c.l.b16 %v648
        %v695 = vunpack.c.l.b16 %v649
        %v696 = vunpack.c.l.b16 %v650
        %v697 = vunpack.c.l.b16 %v651
        %v698 = vunpack.c.l.b16 %v652
        %v699 = vunpack.c.l.b16 %v653
        %v700 = vunpack.c.l.b16 %v654
        %v701 = vunpack.c.l.b16 %v655
        %v702 = vunpack.c.l.b16 %v656
        %v703 = vunpack.c.l.b16 %v657
        %v704 = vunpack.c.l.b16 %v658
        %v705 = vunpack.c.l.b16 %v659
        %v706 = vunpack.c.l.b16 %v660
        %v707 = vunpack.c.l.b16 %v661
        %v708 = vpack.c.b16 %v693, %v692
        %v709 = vpack.c.b16 %v695, %v694
        %v710 = vpack.c.b16 %v697, %v696
        %v711 = vpack.c.b16 %v699, %v698
        %v712 = vpack.c.b16 %v701, %v700
        %v713 = vpack.c.b16 %v703, %v702
        %v714 = vpack.c.b16 %v705, %v704
        %v715 = vpack.c.b16 %v707, %v706
        %724 = vmatprep.subr.bf16.mxu0 0
        %725 = vmatpush1.bf16.msra.mxu0 %v715
        %726 = vmatprep.subr.bf16.mxu0 0
        %727 = vmatpush1.bf16.msra.mxu0 %v714
        %728 = vmatprep.subr.bf16.mxu0 0
        %729 = vmatpush1.bf16.msra.mxu0 %v713
        %730 = vmatprep.subr.bf16.mxu0 0
        %731 = vmatpush1.bf16.msra.mxu0 %v712
        %732 = vmatprep.subr.bf16.mxu0 0
        %733 = vmatpush1.bf16.msra.mxu0 %v711
        %734 = vmatprep.subr.bf16.mxu0 0
        %735 = vmatpush1.bf16.msra.mxu0 %v710
        %736 = vmatprep.subr.bf16.mxu0 0
        %737 = vmatpush1.bf16.msra.mxu0 %v709
        %738 = vmatprep.subr.bf16.mxu0 0
        %739 = vmatpush1.bf16.msra.mxu0 %v708
        %740 = vmatprep.subr.bf16.mxu0 0
        %741 = vmatpush2.bf16.msra.mxu0 0
        %742 = vmatprep.subr.bf16.mxu0 0
        %743 = vmatpush2.bf16.msra.mxu0 0
        %744 = vmatprep.subr.bf16.mxu0 0
        %745 = vmatpush2.bf16.msra.mxu0 0
        %746 = vmatprep.subr.bf16.mxu0 0
        %747 = vmatpush2.bf16.msra.mxu0 0
        %748 = vmatprep.subr.bf16.mxu0 0
        %749 = vmatpush2.bf16.msra.mxu0 0
        %750 = vmatprep.subr.bf16.mxu0 0
        %751 = vmatpush2.bf16.msra.mxu0 0
        %752 = vmatprep.subr.bf16.mxu0 0
        %753 = vmatpush2.bf16.msra.mxu0 0
        %754 = vmatprep.subr.bf16.mxu0 0
        %755 = vmatpush2.bf16.msra.mxu0 0
        %756 = vmatprep.mubr.bf16.mxu0 0
        %757 = vmatmul.mubr.bf16.gmra.mxu0 %v663
        %v758 = vpop.f32.mrf.mxu0
        %v759 = vadd.f32 %v674, %v758
        %v760 = vpop.f32.mrf.mxu0
        %v761 = vpop.f32.mrf.mxu0
        %v762 = vadd.f32 %v674, %v761
        %v763 = vpop.f32.mrf.mxu0
        %764 = vmatprep.mubr.bf16.mxu0 0
        %765 = vmatmul.mubr.bf16.gmra.mxu0 %v664
        %v766 = vpop.f32.mrf.mxu0
        %v767 = vadd.f32 %v674, %v766
        %v768 = vpop.f32.mrf.mxu0
        %v769 = vpop.f32.mrf.mxu0
        %v770 = vadd.f32 %v674, %v769
        %v771 = vpop.f32.mrf.mxu0
        %772 = vmatprep.mubr.bf16.mxu0 0
        %773 = vmatmul.mubr.bf16.gmra.mxu0 %v665
        %v774 = vpop.f32.mrf.mxu0
        %v775 = vadd.f32 %v674, %v774
        %v776 = vpop.f32.mrf.mxu0
        %v777 = vpop.f32.mrf.mxu0
        %v778 = vadd.f32 %v674, %v777
        %v779 = vpop.f32.mrf.mxu0
        %780 = vmatprep.mubr.bf16.mxu0 0
        %781 = vmatmul.mubr.bf16.gmra.mxu0 %v666
        %v782 = vpop.f32.mrf.mxu0
        %v783 = vadd.f32 %v674, %v782
        %v784 = vpop.f32.mrf.mxu0
        %v785 = vpop.f32.mrf.mxu0
        %v786 = vadd.f32 %v674, %v785
        %v787 = vpop.f32.mrf.mxu0
        %788 = vmatprep.mubr.bf16.mxu0 0
        %789 = vmatmul.mubr.bf16.gmra.mxu0 %v667
        %v790 = vpop.f32.mrf.mxu0
        %v791 = vadd.f32 %v674, %v790
        %v792 = vpop.f32.mrf.mxu0
        %v793 = vpop.f32.mrf.mxu0
        %v794 = vadd.f32 %v674, %v793
        %v795 = vpop.f32.mrf.mxu0
        %796 = vmatprep.mubr.bf16.mxu0 0
        %797 = vmatmul.mubr.bf16.gmra.mxu0 %v668
        %v798 = vpop.f32.mrf.mxu0
        %v799 = vadd.f32 %v674, %v798
        %v800 = vpop.f32.mrf.mxu0
        %v801 = vpop.f32.mrf.mxu0
        %v802 = vadd.f32 %v674, %v801
        %v803 = vpop.f32.mrf.mxu0
        %804 = vmatprep.mubr.bf16.mxu0 0
        %805 = vmatmul.mubr.bf16.gmra.mxu0 %v669
        %v806 = vpop.f32.mrf.mxu0
        %v807 = vadd.f32 %v674, %v806
        %v808 = vpop.f32.mrf.mxu0
        %v809 = vpop.f32.mrf.mxu0
        %v810 = vpop.f32.mrf.mxu0
        %811 = vdwg.mxu0
        %v812 = vxor.u32 %v759, 2147483648
        %v813 = vxor.u32 %v762, 2147483648
        %v814 = vxor.u32 %v767, 2147483648
        %v815 = vxor.u32 %v770, 2147483648
        %v816 = vxor.u32 %v775, 2147483648
        %v817 = vxor.u32 %v778, 2147483648
        %v818 = vxor.u32 %v783, 2147483648
        %v819 = vxor.u32 %v786, 2147483648
        %v820 = vxor.u32 %v791, 2147483648
        %v821 = vxor.u32 %v794, 2147483648
        %v822 = vxor.u32 %v799, 2147483648
        %v823 = vxor.u32 %v802, 2147483648
        %v824 = vxor.u32 %v807, 2147483648
        %v825 = vmul.f32 %v812, 1.442695
        %v826 = vpow.pop %v825
        %v827 = vmul.f32 %v813, 1.442695
        %v828 = vpow.pop %v827
        %v829 = vmul.f32 %v814, 1.442695
        %v830 = vpow.pop %v829
        %v831 = vmul.f32 %v815, 1.442695
        %v832 = vpow.pop %v831
        %v833 = vmul.f32 %v816, 1.442695
        %v834 = vpow.pop %v833
        %v835 = vmul.f32 %v817, 1.442695
        %v836 = vpow.pop %v835
        %v837 = vmul.f32 %v818, 1.442695
        %v838 = vpow.pop %v837
        %v839 = vmul.f32 %v819, 1.442695
        %v840 = vpow.pop %v839
        %v841 = vmul.f32 %v820, 1.442695
        %v842 = vpow.pop %v841
        %v843 = vmul.f32 %v821, 1.442695
        %v844 = vpow.pop %v843
        %v845 = vmul.f32 %v822, 1.442695
        %v846 = vpow.pop %v845
        %v847 = vmul.f32 %v823, 1.442695
        %v848 = vpow.pop %v847
        %v849 = vmul.f32 %v824, 1.442695
        %v850 = vpow.pop %v849
        %v851 = vadd.f32 %v826, 1.0
        %v852 = vadd.f32 %v828, 1.0
        %v853 = vadd.f32 %v830, 1.0
        %v854 = vadd.f32 %v832, 1.0
        %v855 = vadd.f32 %v834, 1.0
        %v856 = vadd.f32 %v836, 1.0
        %v857 = vadd.f32 %v838, 1.0
        %v858 = vadd.f32 %v840, 1.0
        %v859 = vadd.f32 %v842, 1.0
        %v860 = vadd.f32 %v844, 1.0
        %v861 = vadd.f32 %v846, 1.0
        %v862 = vadd.f32 %v848, 1.0
        %v863 = vadd.f32 %v850, 1.0
        %v864 = vrcp.pop %v851
        %v865 = vmul.f32 1.0, %v864
        %v866 = vrcp.pop %v852
        %v867 = vmul.f32 1.0, %v866
        %v868 = vrcp.pop %v853
        %v869 = vmul.f32 1.0, %v868
        %v870 = vrcp.pop %v854
        %v871 = vmul.f32 1.0, %v870
        %v872 = vrcp.pop %v855
        %v873 = vmul.f32 1.0, %v872
        %v874 = vrcp.pop %v856
        %v875 = vmul.f32 1.0, %v874
        %v876 = vrcp.pop %v857
        %v877 = vmul.f32 1.0, %v876
        %v878 = vrcp.pop %v858
        %v879 = vmul.f32 1.0, %v878
        %v880 = vrcp.pop %v859
        %v881 = vmul.f32 1.0, %v880
        %v882 = vrcp.pop %v860
        %v883 = vmul.f32 1.0, %v882
        %v884 = vrcp.pop %v861
        %v885 = vmul.f32 1.0, %v884
        %v886 = vrcp.pop %v862
        %v887 = vmul.f32 1.0, %v886
        %v888 = vrcp.pop %v863
        %v889 = vmul.f32 1.0, %v888
        %vm890 = vcmask 7168
        %891 = vst.msk [vmem:[%s280] sm:$0xff] %vm890, %v865
        %892 = vst.msk [vmem:[%s280 + $0x8] sm:$0xff] %vm890, %v867
        %893 = vst.msk [vmem:[%s280 + $0x10] sm:$0xff] %vm890, %v869
        %894 = vst.msk [vmem:[%s280 + $0x18] sm:$0xff] %vm890, %v871
        %895 = vst.msk [vmem:[%s280 + $0x20] sm:$0xff] %vm890, %v873
        %896 = vst.msk [vmem:[%s280 + $0x28] sm:$0xff] %vm890, %v875
        %897 = vst.msk [vmem:[%s280 + $0x30] sm:$0xff] %vm890, %v877
        %898 = vst.msk [vmem:[%s280 + $0x38] sm:$0xff] %vm890, %v879
        %899 = vst.msk [vmem:[%s280 + $0x40] sm:$0xff] %vm890, %v881
        %900 = vst.msk [vmem:[%s280 + $0x48] sm:$0xff] %vm890, %v883
        %901 = vst.msk [vmem:[%s280 + $0x50] sm:$0xff] %vm890, %v885
        %902 = vst.msk [vmem:[%s280 + $0x58] sm:$0xff] %vm890, %v887
        %903 = vst.msk [vmem:[%s280 + $0x60] sm:$0xff] %vm890, %v889
        %s904 = sand.u32 %s178, 1
        %s905 = sand.u32 %s178, 1
        %s906 = smul.addr %s905, 104
        %s907 = scalar_lea.vmem [#allocation2], %s906
        // Predicated region
        $region49: #{network_forward.1} parent=47 // pred_check
          %p908 = pneg %p188
        $region50: #{network_forward.1} parent=47 // pred_check_branch
          %910 = sbr.rel (%p908) target = $region52
        $region51: #{network_forward.1} parent=47 // pred_region
          %s911 = smul.u32 13, %s18
          %s912 = ssub.s32 25, %s911
          %p913 = scmp.lt.s32.totalorder %s912, 13
          %s914 = scalar_select %p913, %s912, 13
          %s915 = smul.u32 128, %s914
          %p916 = scmp.ne.s32.totalorder 0, %s915
          %s917 = smul.addr %s911, 8
          %s918 = scalar_lea.vmem %s7, %s917
          // Predicated region
          $region53: #{network_forward.1} parent=51 // pred_check
            %p919 = pneg %p916
          $region54: #{network_forward.1} parent=51 // pred_check_branch
            %921 = sbr.rel (%p919) target = $region56
          $region55: #{network_forward.1} parent=51 // pred_region
            // Predicated region
            $region57: #{network_forward.1} parent=55 // pred_check
              _
            $region58: #{network_forward.1} parent=55 // pred_check_branch
              %923 = sbr.rel (0) target = $region60
            $region59: #{network_forward.1} parent=55 // pred_region
              // Predicated region
              $region79: #{network_forward.1} parent=59 // pred_check
                _
              $region80: #{network_forward.1} parent=59 // pred_check_branch
                %998 = sbr.rel (0) target = $region82
              $region81: #{network_forward.1} parent=59 // pred_region
                %s999 = sdiv.u32.pop %s914, 13
                %s1000 = srem.u32.pop %s914, 13
                // While loop
                $region83: #{network_forward.1} parent=81 // loop_pre_header
                  _
                $region84: #{network_forward.1} parent=81 // loop_header
                  %s1002 = sphi 0, %s1004
                  %p1003 = scmp.ge.s32.totalorder %s1002, %s999
                  %s1007 = sphi 0, %s1038
                  %s1008 = sphi %s907, %s1041
                  %s1009 = sphi %s918, %s1042
                $region85: #{network_forward.1} parent=81 // loop_header_branch
                  %1006 = sbr.rel (%p1003) target = $region89
                $region86: #{network_forward.1} parent=81 // loop_body
                  %v1010 = vld [vmem:[%s1008] sm:$0xff]
                  %1011 = vst [vmem:[%s1009] sm:$0xff] %v1010
                  %v1012 = vld [vmem:[%s1008 + $0x8] sm:$0xff]
                  %1013 = vst [vmem:[%s1009 + $0x8] sm:$0xff] %v1012
                  %v1014 = vld [vmem:[%s1008 + $0x10] sm:$0xff]
                  %1015 = vst [vmem:[%s1009 + $0x10] sm:$0xff] %v1014
                  %v1016 = vld [vmem:[%s1008 + $0x18] sm:$0xff]
                  %1017 = vst [vmem:[%s1009 + $0x18] sm:$0xff] %v1016
                  %v1018 = vld [vmem:[%s1008 + $0x20] sm:$0xff]
                  %1019 = vst [vmem:[%s1009 + $0x20] sm:$0xff] %v1018
                  %v1020 = vld [vmem:[%s1008 + $0x28] sm:$0xff]
                  %1021 = vst [vmem:[%s1009 + $0x28] sm:$0xff] %v1020
                  %v1022 = vld [vmem:[%s1008 + $0x30] sm:$0xff]
                  %1023 = vst [vmem:[%s1009 + $0x30] sm:$0xff] %v1022
                  %v1024 = vld [vmem:[%s1008 + $0x38] sm:$0xff]
                  %1025 = vst [vmem:[%s1009 + $0x38] sm:$0xff] %v1024
                  %v1026 = vld [vmem:[%s1008 + $0x40] sm:$0xff]
                  %1027 = vst [vmem:[%s1009 + $0x40] sm:$0xff] %v1026
                  %v1028 = vld [vmem:[%s1008 + $0x48] sm:$0xff]
                  %1029 = vst [vmem:[%s1009 + $0x48] sm:$0xff] %v1028
                  %v1030 = vld [vmem:[%s1008 + $0x50] sm:$0xff]
                  %1031 = vst [vmem:[%s1009 + $0x50] sm:$0xff] %v1030
                  %v1032 = vld [vmem:[%s1008 + $0x58] sm:$0xff]
                  %1033 = vst [vmem:[%s1009 + $0x58] sm:$0xff] %v1032
                  %v1034 = vld [vmem:[%s1008 + $0x60] sm:$0xff]
                  %1035 = vst [vmem:[%s1009 + $0x60] sm:$0xff] %v1034
                  %s1036 = sadd.s32 1, %s1007
                  %p1037 = scmp.ge.s32.totalorder %s1036, %s999
                  %s1038 = scalar_select %p1037, 0, %s1036
                  %s1039 = smul.u32 %s1038, 104
                  %s1040 = smul.u32 %s1038, 104
                  %s1041 = scalar_lea.vmem %s907, %s1039 [#allocation2]
                  %s1042 = scalar_lea.vmem %s918, %s1040
                $region87: #{network_forward.1} parent=81 // loop_footer
                  %s1004 = sadd.s32 %s1002, 1
                $region88: #{network_forward.1} parent=81 // loop_footer_branch
                  %1001 = sbr.rel target = $region84
                $region89: #{network_forward.1} parent=81 // loop_exit
                  _
                %s1043 = sdiv.u32.pop %s914, 13
                %s1044 = srem.u32.pop %s914, 13
                %s1045 = smul.u32 %s1043, 13
                %s1046 = smul.u32 8, %s1045
                %s1047 = scalar_lea.vmem %s907, %s1046 [#allocation2]
                %s1048 = smul.u32 8, %s1045
                %s1049 = scalar_lea.vmem %s918, %s1048
                // While loop
                $region90: #{network_forward.1} parent=81 // loop_pre_header
                  _
                $region91: #{network_forward.1} parent=81 // loop_header
                  %s1051 = sphi 0, %s1053
                  %p1052 = scmp.ge.s32.totalorder %s1051, %s1044
                  %s1056 = sphi 0, %s1063
                  %s1057 = sphi %s1047, %s1066
                  %s1058 = sphi %s1049, %s1067
                $region92: #{network_forward.1} parent=81 // loop_header_branch
                  %1055 = sbr.rel (%p1052) target = $region96
                $region93: #{network_forward.1} parent=81 // loop_body
                  %v1059 = vld [vmem:[%s1057] sm:$0xff]
                  %1060 = vst [vmem:[%s1058] sm:$0xff] %v1059
                  %s1061 = sadd.s32 1, %s1056
                  %p1062 = scmp.ge.s32.totalorder %s1061, %s1044
                  %s1063 = scalar_select %p1062, 0, %s1061
                  %s1064 = smul.u32 %s1063, 8
                  %s1065 = smul.u32 %s1063, 8
                  %s1066 = scalar_lea.vmem %s1047, %s1064 [#allocation2]
                  %s1067 = scalar_lea.vmem %s1049, %s1065
                $region94: #{network_forward.1} parent=81 // loop_footer
                  %s1053 = sadd.s32 %s1051, 1
                $region95: #{network_forward.1} parent=81 // loop_footer_branch
                  %1050 = sbr.rel target = $region91
                $region96: #{network_forward.1} parent=81 // loop_exit
                  _
              $region82: #{network_forward.1} parent=59 // pred_fallthru
                _
              // Predicated region
              $region97: #{network_forward.1} parent=59 // pred_check
                _
              $region98: #{network_forward.1} parent=59 // pred_check_branch
                %1069 = sbr.rel target = $region100
              $region99: #{network_forward.1} parent=59 // pred_region
                _
              $region100: #{network_forward.1} parent=59 // pred_fallthru
                _
            $region60: #{network_forward.1} parent=55 // pred_fallthru
              _
            // Predicated region
            $region61: #{network_forward.1} parent=55 // pred_check
              _
            $region62: #{network_forward.1} parent=55 // pred_check_branch
              %925 = sbr.rel target = $region64
            $region63: #{network_forward.1} parent=55 // pred_region
              %s927 = ssub.s32 256, 1
              %s928 = sdiv.u32.pop %s914, 13
              %s929 = srem.u32.pop %s914, 13
              // While loop
              $region65: #{network_forward.1} parent=63 // loop_pre_header
                _
              $region66: #{network_forward.1} parent=63 // loop_header
                %s931 = sphi 0, %s933
                %p932 = scmp.ge.s32.totalorder %s931, %s928
                %s936 = sphi 0, %s967
                %s937 = sphi %s907, %s970
                %s938 = sphi %s918, %s971
              $region67: #{network_forward.1} parent=63 // loop_header_branch
                %935 = sbr.rel (%p932) target = $region71
              $region68: #{network_forward.1} parent=63 // loop_body
                %v939 = vld [vmem:[%s937] sm:%s927]
                %940 = vst [vmem:[%s938] sm:%s927] %v939
                %v941 = vld [vmem:[%s937 + $0x8] sm:%s927]
                %942 = vst [vmem:[%s938 + $0x8] sm:%s927] %v941
                %v943 = vld [vmem:[%s937 + $0x10] sm:%s927]
                %944 = vst [vmem:[%s938 + $0x10] sm:%s927] %v943
                %v945 = vld [vmem:[%s937 + $0x18] sm:%s927]
                %946 = vst [vmem:[%s938 + $0x18] sm:%s927] %v945
                %v947 = vld [vmem:[%s937 + $0x20] sm:%s927]
                %948 = vst [vmem:[%s938 + $0x20] sm:%s927] %v947
                %v949 = vld [vmem:[%s937 + $0x28] sm:%s927]
                %950 = vst [vmem:[%s938 + $0x28] sm:%s927] %v949
                %v951 = vld [vmem:[%s937 + $0x30] sm:%s927]
                %952 = vst [vmem:[%s938 + $0x30] sm:%s927] %v951
                %v953 = vld [vmem:[%s937 + $0x38] sm:%s927]
                %954 = vst [vmem:[%s938 + $0x38] sm:%s927] %v953
                %v955 = vld [vmem:[%s937 + $0x40] sm:%s927]
                %956 = vst [vmem:[%s938 + $0x40] sm:%s927] %v955
                %v957 = vld [vmem:[%s937 + $0x48] sm:%s927]
                %958 = vst [vmem:[%s938 + $0x48] sm:%s927] %v957
                %v959 = vld [vmem:[%s937 + $0x50] sm:%s927]
                %960 = vst [vmem:[%s938 + $0x50] sm:%s927] %v959
                %v961 = vld [vmem:[%s937 + $0x58] sm:%s927]
                %962 = vst [vmem:[%s938 + $0x58] sm:%s927] %v961
                %v963 = vld [vmem:[%s937 + $0x60] sm:%s927]
                %964 = vst [vmem:[%s938 + $0x60] sm:%s927] %v963
                %s965 = sadd.s32 1, %s936
                %p966 = scmp.ge.s32.totalorder %s965, %s928
                %s967 = scalar_select %p966, 0, %s965
                %s968 = smul.u32 %s967, 104
                %s969 = smul.u32 %s967, 104
                %s970 = scalar_lea.vmem %s907, %s968 [#allocation2]
                %s971 = scalar_lea.vmem %s918, %s969
              $region69: #{network_forward.1} parent=63 // loop_footer
                %s933 = sadd.s32 %s931, 1
              $region70: #{network_forward.1} parent=63 // loop_footer_branch
                %930 = sbr.rel target = $region66
              $region71: #{network_forward.1} parent=63 // loop_exit
                _
              %s972 = sdiv.u32.pop %s914, 13
              %s973 = srem.u32.pop %s914, 13
              %s974 = smul.u32 %s972, 13
              %s975 = smul.u32 8, %s974
              %s976 = scalar_lea.vmem %s907, %s975 [#allocation2]
              %s977 = smul.u32 8, %s974
              %s978 = scalar_lea.vmem %s918, %s977
              // While loop
              $region72: #{network_forward.1} parent=63 // loop_pre_header
                _
              $region73: #{network_forward.1} parent=63 // loop_header
                %s980 = sphi 0, %s982
                %p981 = scmp.ge.s32.totalorder %s980, %s973
                %s985 = sphi 0, %s992
                %s986 = sphi %s976, %s995
                %s987 = sphi %s978, %s996
              $region74: #{network_forward.1} parent=63 // loop_header_branch
                %984 = sbr.rel (%p981) target = $region78
              $region75: #{network_forward.1} parent=63 // loop_body
                %v988 = vld [vmem:[%s986] sm:%s927]
                %989 = vst [vmem:[%s987] sm:%s927] %v988
                %s990 = sadd.s32 1, %s985
                %p991 = scmp.ge.s32.totalorder %s990, %s973
                %s992 = scalar_select %p991, 0, %s990
                %s993 = smul.u32 %s992, 8
                %s994 = smul.u32 %s992, 8
                %s995 = scalar_lea.vmem %s976, %s993 [#allocation2]
                %s996 = scalar_lea.vmem %s978, %s994
              $region76: #{network_forward.1} parent=63 // loop_footer
                %s982 = sadd.s32 %s980, 1
              $region77: #{network_forward.1} parent=63 // loop_footer_branch
                %979 = sbr.rel target = $region73
              $region78: #{network_forward.1} parent=63 // loop_exit
                _
            $region64: #{network_forward.1} parent=55 // pred_fallthru
              _
          $region56: #{network_forward.1} parent=51 // pred_fallthru
            _
          %1070 = vnop
        $region52: #{network_forward.1} parent=47 // pred_fallthru
          _
      $region48: #{network_forward.1} parent=5 // pred_fallthru
        _
      %p1071 = scmp.le.s32.totalorder 2, %s13
      // Predicated region
      $region101: #{network_forward.1} parent=5 // pred_check
        %p1072 = pneg %p1071
      $region102: #{network_forward.1} parent=5 // pred_check_branch
        %1074 = sbr.rel (%p1072) target = $region104
      $region103: #{network_forward.1} parent=5 // pred_region
        %s1075 = ssub.s32 %s13, 2
        // Predicated region
        $region105: #{network_forward.1} parent=103 // pred_check
          %p1076 = pneg %p194
        $region106: #{network_forward.1} parent=103 // pred_check_branch
          %1078 = sbr.rel (%p1076) target = $region108
        $region107: #{network_forward.1} parent=103 // pred_region
          %s1079 = sand.u32 %s179, 1
          %s1080 = sand.u32 %s179, 1
          %s1081 = smul.addr %s1080, 104
          %s1082 = scalar_lea.vmem [#allocation2], %s1081
        $region108: #{network_forward.1} parent=103 // pred_fallthru
          _
      $region104: #{network_forward.1} parent=5 // pred_fallthru
        _
    $region6: #{network_forward.1} parent=1 // loop_footer
      %s17 = sadd.s32 1, %s13
    $region7: #{network_forward.1} parent=1 // loop_footer_branch
      %12 = sbr.rel target = $region3
    $region8: #{network_forward.1} parent=1 // loop_exit
      _

</llo_original>
